<compile_context>
chip_gen: v6e
topology: v6e:2x2x1
jax: 0.10.0
libtpu: 0.0.40
codegen_flags: <defaults>
</compile_context>

<pallas_src>
import functools

import jax
import jax.numpy as jnp
import numpy as np
from jax import lax
from jax.experimental import pallas as pl
from jax.experimental.pallas import tpu as pltpu


# ----------------------------------------------------------------------------
# Pallas kernel: whole NormalBlock forward for one batch sample.
#   fused(conv3x3 grouped -> conv1x1+BN) -> PReLU ->
#   fused(conv3x3 grouped -> conv1x1+BN) -> +residual -> PReLU
# Layout: activations are (C, M) with M = H*W on the lane axis (lane-dense).
# ----------------------------------------------------------------------------
def _normal_block_kernel(x_ref, w1_ref, b1_ref, w2_ref, b2_ref, alpha_ref,
                         o_ref, *, H, W):
    C = x_ref.shape[1]
    M = H * W
    P = W + 1                      # halo covering every tap offset |dy*W + dx|

    x = x_ref[0]                   # (C, M) f32, spatial on lanes

    # Column-edge masks shared by both convs: lanes whose w coordinate would
    # read across a row boundary for the dx = -1 / dx = +1 taps.
    col = lax.broadcasted_iota(jnp.int32, (1, M), 1) % W
    ok_left = col != 0             # dx = -1 is valid here
    ok_right = col != W - 1        # dx = +1 is valid here

    def conv_pair(a, w_ref, b_ref):
        # Fused {grouped 3x3 conv -> 1x1 conv + BN} as one (C, 9C) @ (9C, M)
        # MXU matmul over an in-register im2col of `a`.
        zp = jnp.zeros((C, P), a.dtype)
        ap = jnp.concatenate([zp, a, zp], axis=1)          # (C, M + 2P)
        taps = []
        for dy in (-1, 0, 1):
            for dx in (-1, 0, 1):
                s = P + dy * W + dx
                t = ap[:, s:s + M]                         # static lane slice
                if dx == -1:
                    t = jnp.where(ok_left, t, 0.0)
                elif dx == 1:
                    t = jnp.where(ok_right, t, 0.0)
                taps.append(t)
        xcol = jnp.concatenate(taps, axis=0)               # (9C, M)
        acc = jnp.dot(w_ref[...], xcol.astype(w_ref.dtype),
                      preferred_element_type=jnp.float32)  # (C, M)
        return acc + b_ref[...]                            # + (C, 1) bias

    a1 = alpha_ref[0]
    aout = alpha_ref[1]

    t = conv_pair(x, w1_ref, b1_ref)                          # pair 1
    t = jnp.maximum(t, 0.0) + a1 * jnp.minimum(t, 0.0)        # PReLU
    t = conv_pair(t, w2_ref, b2_ref)                          # pair 2
    t = t + x                                                 # residual
    o_ref[0] = jnp.maximum(t, 0.0) + aout * jnp.minimum(t, 0.0)  # final PReLU


# ----------------------------------------------------------------------------
# Parameter preprocessing (one-time, plain-JAX glue in the wrapper)
# ----------------------------------------------------------------------------
def _grouped_to_dense(wg, chan, groups):
    """PyTorch grouped-conv weight (2C, C/groups, 3, 3) -> (9, C, 2C) dense
    per-tap matrices with block-diagonal group structure."""
    c2 = 2 * chan
    gin = chan // groups
    gout = c2 // groups
    w = jnp.transpose(wg, (2, 3, 1, 0)).reshape(9, gin, c2)  # [tap, in-in-grp, out]
    dense = jnp.zeros((9, chan, c2), jnp.float32)
    for g in range(groups):
        dense = dense.at[:, g * gin:(g + 1) * gin,
                         g * gout:(g + 1) * gout].set(
            w[:, :, g * gout:(g + 1) * gout])
    return dense


def _fold_bn_into_1x1(w, gamma, beta, mean, var, eps=1e-5):
    """1x1 conv (Cout, Cin, 1, 1) + eval-mode BatchNorm -> (Cin, Cout), (Cout,)."""
    s = gamma / jnp.sqrt(var + eps)
    wf = (w[:, :, 0, 0] * s[:, None]).T
    bf = beta - mean * s
    return wf.astype(jnp.float32), bf.astype(jnp.float32)


def _fuse_pair(wg, w1x1, bn, chan, groups, mxu_dtype):
    """Fuse {grouped 3x3 conv, 1x1 conv, BN} into one (C, 9C) matmul weight
    (channel-major layout) and a (C, 1) bias."""
    dense = _grouped_to_dense(wg, chan, groups)               # (9, C, 2C)
    wf, bf = _fold_bn_into_1x1(w1x1, *bn)                     # (2C, C), (C,)
    w_eff = jnp.einsum("tim,mo->tio", dense, wf)              # (9, C, C)
    w_all = w_eff.reshape(9 * chan, chan).T                   # (C, 9C)
    return w_all.astype(mxu_dtype), bf.reshape(chan, 1)


# ----------------------------------------------------------------------------
# Wrapper
# ----------------------------------------------------------------------------
def normal_block_pallas(x_nchw, params, chan, groups, mxu_dtype=jnp.float32):
    N, C, H, W = x_nchw.shape
    assert C == chan
    M = H * W

    # Free (contiguous) reshape NCHW -> (N, C, H*W); no transpose, no padding.
    x_flat = x_nchw.reshape(N, C, M).astype(jnp.float32)

    w_all1, b1 = _fuse_pair(params["wg1"], params["w1"], params["bn1"],
                            chan, groups, mxu_dtype)
    w_all2, b2 = _fuse_pair(params["wg2"], params["w2"], params["bn2"],
                            chan, groups, mxu_dtype)
    alphas = jnp.asarray([params["alpha1"], params["alpha_out"]], jnp.float32)

    kernel = functools.partial(_normal_block_kernel, H=H, W=W)

    out_flat = pl.pallas_call(
        kernel,
        out_shape=jax.ShapeDtypeStruct((N, C, M), jnp.float32),
        grid=(N,),
        in_specs=[
            pl.BlockSpec((1, C, M), lambda b: (b, 0, 0)),       # x (per batch)
            pl.BlockSpec((C, 9 * C), lambda b: (0, 0)),         # fused W, pair 1
            pl.BlockSpec((C, 1), lambda b: (0, 0)),             # bias, pair 1
            pl.BlockSpec((C, 9 * C), lambda b: (0, 0)),         # fused W, pair 2
            pl.BlockSpec((C, 1), lambda b: (0, 0)),             # bias, pair 2
            pl.BlockSpec(memory_space=pltpu.MemorySpace.SMEM),  # PReLU alphas
        ],
        out_specs=pl.BlockSpec((1, C, M), lambda b: (b, 0, 0)),
        compiler_params=pltpu.CompilerParams(
            dimension_semantics=("parallel",)),                 # v7x: 2 TCs
    )(x_flat, w_all1, b1, w_all2, b2, alphas)

    return out_flat.reshape(N, C, H, W)                         # NCHW, free


# ----------------------------------------------------------------------------
# Pure-JAX reference (NCHW, mirrors the PyTorch module with eval-mode BN)
# ----------------------------------------------------------------------------
def normal_block_reference(x, params, groups):
    def conv(x, w, g, pad):
        return lax.conv_general_dilated(
            x, w, (1, 1), [(pad, pad), (pad, pad)],
            feature_group_count=g,
            dimension_numbers=("NCHW", "OIHW", "NCHW"),
            precision=lax.Precision.HIGHEST)

    def bn(x, gamma, beta, mean, var, eps=1e-5):
        s = gamma / jnp.sqrt(var + eps)
        return x * s[None, :, None, None] + (beta - mean * s)[None, :, None, None]

    def prelu(x, a):
        return jnp.where(x >= 0, x, a * x)

    t = conv(x, params["wg1"], groups, 1)
    t = prelu(bn(conv(t, params["w1"], 1, 0), *params["bn1"]), params["alpha1"])
    t = conv(t, params["wg2"], groups, 1)
    t = bn(conv(t, params["w2"], 1, 0), *params["bn2"])
    t = t + x
    return prelu(t, params["alpha_out"])


# ----------------------------------------------------------------------------
if __name__ == "__main__":
    # Small but faithful config: chan=16, group_size=8 -> 2 groups.
    N, CHAN, H, W = 2, 16, 16, 16
    GROUP_SIZE = 8
    assert CHAN % GROUP_SIZE == 0
    GROUPS = CHAN // GROUP_SIZE
    C2 = 2 * CHAN

    key = jax.random.PRNGKey(0)
    ks = jax.random.split(key, 12)

    x = jax.random.normal(ks[0], (N, CHAN, H, W), jnp.float32)      # NCHW input

    params = {
        # grouped 3x3 convs: weight (2C, C/groups, 3, 3), bias=False
        "wg1": 0.1 * jax.random.normal(ks[1], (C2, CHAN // GROUPS, 3, 3), jnp.float32),
        "wg2": 0.1 * jax.random.normal(ks[2], (C2, CHAN // GROUPS, 3, 3), jnp.float32),
        # 1x1 convs: weight (C, 2C, 1, 1), bias=False
        "w1": 0.1 * jax.random.normal(ks[3], (CHAN, C2, 1, 1), jnp.float32),
        "w2": 0.1 * jax.random.normal(ks[4], (CHAN, C2, 1, 1), jnp.float32),
        # BatchNorm2d params (gamma, beta, running_mean, running_var), eval mode
        "bn1": (jax.random.uniform(ks[5], (CHAN,), jnp.float32, 0.5, 1.5),
                0.1 * jax.random.normal(ks[6], (CHAN,), jnp.float32),
                0.1 * jax.random.normal(ks[7], (CHAN,), jnp.float32),
                jax.random.uniform(ks[8], (CHAN,), jnp.float32, 0.5, 1.5)),
        "bn2": (jax.random.uniform(ks[9], (CHAN,), jnp.float32, 0.5, 1.5),
                0.1 * jax.random.normal(ks[10], (CHAN,), jnp.float32),
                0.1 * jax.random.normal(ks[11], (CHAN,), jnp.float32),
                jax.random.uniform(ks[5], (CHAN,), jnp.float32, 0.5, 1.5)),
        # PReLU(num_parameters=1) default init
        "alpha1": 0.25,
        "alpha_out": 0.25,
    }

    # On v6e/v7x pass mxu_dtype=jnp.bfloat16 for 2x MXU throughput; f32 here
    # keeps the check against the reference tight.
    fwd = jax.jit(functools.partial(normal_block_pallas, chan=CHAN, groups=GROUPS))

    out = jax.block_until_ready(fwd(x, params))
    ref = jax.block_until_ready(normal_block_reference(x, params, GROUPS))

    np.testing.assert_allclose(np.asarray(out), np.asarray(ref),
                               rtol=1e-3, atol=1e-4)
    print("KERNEL_OK")
</pallas_src>

<mosaic_0001>
module attributes {stable_mosaic.version = 11 : i64} {
  func.func @_normal_block_kernel(%arg0: i32, %arg1: memref<1x16x256xf32, #tpu.memory_space<vmem>>, %arg2: memref<16x144xf32, #tpu.memory_space<vmem>>, %arg3: memref<16x1xf32, #tpu.memory_space<vmem>>, %arg4: memref<16x144xf32, #tpu.memory_space<vmem>>, %arg5: memref<16x1xf32, #tpu.memory_space<vmem>>, %arg6: memref<2xf32, #tpu.memory_space<smem>>, %arg7: memref<1x16x256xf32, #tpu.memory_space<vmem>>) attributes {dimension_semantics = [#tpu.dimension_semantics<parallel>], iteration_bounds = array<i64: 2>, scalar_prefetch = 0 : i64, scratch_operands = 0 : i64, tpu.core_type = #tpu.core_type<tc>, window_params = [{transform_indices = @transform_0, window_bounds = array<i64: 1, 16, 256>}, {pipeline_mode = #tpu.pipeline_mode<synchronous>, transform_indices = @transform_1, window_bounds = array<i64: 16, 144>}, {pipeline_mode = #tpu.pipeline_mode<synchronous>, transform_indices = @transform_2, window_bounds = array<i64: 16, 1>}, {pipeline_mode = #tpu.pipeline_mode<synchronous>, transform_indices = @transform_3, window_bounds = array<i64: 16, 144>}, {pipeline_mode = #tpu.pipeline_mode<synchronous>, transform_indices = @transform_4, window_bounds = array<i64: 16, 1>}, {transform_indices = @transform_5, window_bounds = array<i64: 2>}, {transform_indices = @transform_6, window_bounds = array<i64: 1, 16, 256>}]} {
    %c0 = arith.constant 0 : index
    %c0_0 = arith.constant 0 : index
    %c0_1 = arith.constant 0 : index
    %0 = vector.load %arg1[%c0, %c0_0, %c0_1] : memref<1x16x256xf32, #tpu.memory_space<vmem>>, vector<1x16x256xf32>
    %1 = vector.shape_cast %0 : vector<1x16x256xf32> to vector<16x256xf32>
    %2 = tpu.iota {dimensions = array<i32: 1>} : vector<1x256xi32>
    %c16_i32 = arith.constant 16 : i32
    %c0_i32 = arith.constant 0 : i32
    %3 = arith.cmpi eq, %c16_i32, %c0_i32 : i32
    %c1_i32 = arith.constant 1 : i32
    %4 = arith.select %3, %c1_i32, %c16_i32 : i32
    %5 = vector.broadcast %4 : i32 to vector<1x256xi32>
    %6 = arith.remsi %2, %5 : vector<1x256xi32>
    %c0_i32_2 = arith.constant 0 : i32
    %7 = vector.broadcast %c0_i32_2 : i32 to vector<1x256xi32>
    %8 = arith.cmpi ne, %6, %7 : vector<1x256xi32>
    %c0_i32_3 = arith.constant 0 : i32
    %9 = vector.broadcast %c0_i32_3 : i32 to vector<1x256xi32>
    %10 = arith.cmpi slt, %6, %9 : vector<1x256xi32>
    %c0_i32_4 = arith.constant 0 : i32
    %11 = arith.cmpi slt, %4, %c0_i32_4 : i32
    %12 = vector.broadcast %11 : i1 to vector<1x256xi1>
    %13 = vector.broadcast %12 : vector<1x256xi1> to vector<1x256xi1>
    %14 = arith.xori %10, %13 : vector<1x256xi1>
    %15 = arith.andi %14, %8 : vector<1x256xi1>
    %16 = vector.broadcast %4 : i32 to vector<1x256xi32>
    %17 = arith.addi %6, %16 : vector<1x256xi32>
    %18 = arith.select %15, %17, %6 : vector<1x256xi1>, vector<1x256xi32>
    %c0_i32_5 = arith.constant 0 : i32
    %19 = vector.broadcast %c0_i32_5 : i32 to vector<1x256xi32>
    %20 = arith.cmpi ne, %18, %19 : vector<1x256xi32>
    %c15_i32 = arith.constant 15 : i32
    %21 = vector.broadcast %c15_i32 : i32 to vector<1x256xi32>
    %22 = arith.cmpi ne, %18, %21 : vector<1x256xi32>
    %c0_6 = arith.constant 0 : index
    %23 = memref.load %arg6[%c0_6] : memref<2xf32, #tpu.memory_space<smem>>
    %c1 = arith.constant 1 : index
    %24 = memref.load %arg6[%c1] : memref<2xf32, #tpu.memory_space<smem>>
    %cst = arith.constant 0.000000e+00 : f32
    %25 = vector.broadcast %cst : f32 to vector<16x17xf32>
    %26 = tpu.concatenate %25, %1, %25 in 1 : vector<16x17xf32>, vector<16x256xf32>, vector<16x17xf32> -> vector<16x290xf32>
    %27 = vector.extract_strided_slice %26 {offsets = [0, 0], sizes = [16, 256], strides = [1, 1]} : vector<16x290xf32> to vector<16x256xf32>
    %cst_7 = arith.constant 0.000000e+00 : f32
    %28 = vector.shape_cast %20 : vector<1x256xi1> to vector<1x256xi1>
    %29 = vector.broadcast %28 : vector<1x256xi1> to vector<16x256xi1>
    %30 = vector.broadcast %cst_7 : f32 to vector<16x256xf32>
    %31 = arith.select %29, %27, %30 : vector<16x256xi1>, vector<16x256xf32>
    %32 = vector.extract_strided_slice %26 {offsets = [0, 1], sizes = [16, 256], strides = [1, 1]} : vector<16x290xf32> to vector<16x256xf32>
    %33 = vector.extract_strided_slice %26 {offsets = [0, 2], sizes = [16, 256], strides = [1, 1]} : vector<16x290xf32> to vector<16x256xf32>
    %cst_8 = arith.constant 0.000000e+00 : f32
    %34 = vector.shape_cast %22 : vector<1x256xi1> to vector<1x256xi1>
    %35 = vector.broadcast %34 : vector<1x256xi1> to vector<16x256xi1>
    %36 = vector.broadcast %cst_8 : f32 to vector<16x256xf32>
    %37 = arith.select %35, %33, %36 : vector<16x256xi1>, vector<16x256xf32>
    %38 = vector.extract_strided_slice %26 {offsets = [0, 16], sizes = [16, 256], strides = [1, 1]} : vector<16x290xf32> to vector<16x256xf32>
    %cst_9 = arith.constant 0.000000e+00 : f32
    %39 = vector.shape_cast %20 : vector<1x256xi1> to vector<1x256xi1>
    %40 = vector.broadcast %39 : vector<1x256xi1> to vector<16x256xi1>
    %41 = vector.broadcast %cst_9 : f32 to vector<16x256xf32>
    %42 = arith.select %40, %38, %41 : vector<16x256xi1>, vector<16x256xf32>
    %43 = vector.extract_strided_slice %26 {offsets = [0, 17], sizes = [16, 256], strides = [1, 1]} : vector<16x290xf32> to vector<16x256xf32>
    %44 = vector.extract_strided_slice %26 {offsets = [0, 18], sizes = [16, 256], strides = [1, 1]} : vector<16x290xf32> to vector<16x256xf32>
    %cst_10 = arith.constant 0.000000e+00 : f32
    %45 = vector.shape_cast %22 : vector<1x256xi1> to vector<1x256xi1>
    %46 = vector.broadcast %45 : vector<1x256xi1> to vector<16x256xi1>
    %47 = vector.broadcast %cst_10 : f32 to vector<16x256xf32>
    %48 = arith.select %46, %44, %47 : vector<16x256xi1>, vector<16x256xf32>
    %49 = vector.extract_strided_slice %26 {offsets = [0, 32], sizes = [16, 256], strides = [1, 1]} : vector<16x290xf32> to vector<16x256xf32>
    %cst_11 = arith.constant 0.000000e+00 : f32
    %50 = vector.shape_cast %20 : vector<1x256xi1> to vector<1x256xi1>
    %51 = vector.broadcast %50 : vector<1x256xi1> to vector<16x256xi1>
    %52 = vector.broadcast %cst_11 : f32 to vector<16x256xf32>
    %53 = arith.select %51, %49, %52 : vector<16x256xi1>, vector<16x256xf32>
    %54 = vector.extract_strided_slice %26 {offsets = [0, 33], sizes = [16, 256], strides = [1, 1]} : vector<16x290xf32> to vector<16x256xf32>
    %55 = vector.extract_strided_slice %26 {offsets = [0, 34], sizes = [16, 256], strides = [1, 1]} : vector<16x290xf32> to vector<16x256xf32>
    %cst_12 = arith.constant 0.000000e+00 : f32
    %56 = vector.shape_cast %22 : vector<1x256xi1> to vector<1x256xi1>
    %57 = vector.broadcast %56 : vector<1x256xi1> to vector<16x256xi1>
    %58 = vector.broadcast %cst_12 : f32 to vector<16x256xf32>
    %59 = arith.select %57, %55, %58 : vector<16x256xi1>, vector<16x256xf32>
    %60 = tpu.concatenate %31, %32, %37, %42, %43, %48, %53, %54, %59 in 0 : vector<16x256xf32>, vector<16x256xf32>, vector<16x256xf32>, vector<16x256xf32>, vector<16x256xf32>, vector<16x256xf32>, vector<16x256xf32>, vector<16x256xf32>, vector<16x256xf32> -> vector<144x256xf32>
    %c0_13 = arith.constant 0 : index
    %c0_14 = arith.constant 0 : index
    %61 = vector.load %arg2[%c0_13, %c0_14] : memref<16x144xf32, #tpu.memory_space<vmem>>, vector<16x144xf32>
    %cst_15 = arith.constant dense<0.000000e+00> : vector<16x256xf32>
    %62 = tpu.matmul %61, %60, %cst_15 {dimension_numbers = #tpu.dot_dimension_numbers<[1], [0], [0], [1], [0, 0, 1, 1], [], []>} : vector<16x144xf32>, vector<144x256xf32>, vector<16x256xf32> -> vector<16x256xf32>
    %c0_16 = arith.constant 0 : index
    %c0_17 = arith.constant 0 : index
    %63 = vector.load %arg3[%c0_16, %c0_17] : memref<16x1xf32, #tpu.memory_space<vmem>>, vector<16x1xf32>
    %64 = vector.broadcast %63 : vector<16x1xf32> to vector<16x256xf32>
    %65 = arith.addf %62, %64 : vector<16x256xf32>
    %cst_18 = arith.constant 0.000000e+00 : f32
    %66 = vector.broadcast %cst_18 : f32 to vector<16x256xf32>
    %67 = arith.maximumf %65, %66 : vector<16x256xf32>
    %cst_19 = arith.constant 0.000000e+00 : f32
    %68 = vector.broadcast %cst_19 : f32 to vector<16x256xf32>
    %69 = arith.minimumf %65, %68 : vector<16x256xf32>
    %70 = vector.broadcast %23 : f32 to vector<16x256xf32>
    %71 = arith.mulf %70, %69 : vector<16x256xf32>
    %72 = arith.addf %67, %71 : vector<16x256xf32>
    %cst_20 = arith.constant 0.000000e+00 : f32
    %73 = vector.broadcast %cst_20 : f32 to vector<16x17xf32>
    %74 = tpu.concatenate %73, %72, %73 in 1 : vector<16x17xf32>, vector<16x256xf32>, vector<16x17xf32> -> vector<16x290xf32>
    %75 = vector.extract_strided_slice %74 {offsets = [0, 0], sizes = [16, 256], strides = [1, 1]} : vector<16x290xf32> to vector<16x256xf32>
    %cst_21 = arith.constant 0.000000e+00 : f32
    %76 = vector.shape_cast %20 : vector<1x256xi1> to vector<1x256xi1>
    %77 = vector.broadcast %76 : vector<1x256xi1> to vector<16x256xi1>
    %78 = vector.broadcast %cst_21 : f32 to vector<16x256xf32>
    %79 = arith.select %77, %75, %78 : vector<16x256xi1>, vector<16x256xf32>
    %80 = vector.extract_strided_slice %74 {offsets = [0, 1], sizes = [16, 256], strides = [1, 1]} : vector<16x290xf32> to vector<16x256xf32>
    %81 = vector.extract_strided_slice %74 {offsets = [0, 2], sizes = [16, 256], strides = [1, 1]} : vector<16x290xf32> to vector<16x256xf32>
    %cst_22 = arith.constant 0.000000e+00 : f32
    %82 = vector.shape_cast %22 : vector<1x256xi1> to vector<1x256xi1>
    %83 = vector.broadcast %82 : vector<1x256xi1> to vector<16x256xi1>
    %84 = vector.broadcast %cst_22 : f32 to vector<16x256xf32>
    %85 = arith.select %83, %81, %84 : vector<16x256xi1>, vector<16x256xf32>
    %86 = vector.extract_strided_slice %74 {offsets = [0, 16], sizes = [16, 256], strides = [1, 1]} : vector<16x290xf32> to vector<16x256xf32>
    %cst_23 = arith.constant 0.000000e+00 : f32
    %87 = vector.shape_cast %20 : vector<1x256xi1> to vector<1x256xi1>
    %88 = vector.broadcast %87 : vector<1x256xi1> to vector<16x256xi1>
    %89 = vector.broadcast %cst_23 : f32 to vector<16x256xf32>
    %90 = arith.select %88, %86, %89 : vector<16x256xi1>, vector<16x256xf32>
    %91 = vector.extract_strided_slice %74 {offsets = [0, 17], sizes = [16, 256], strides = [1, 1]} : vector<16x290xf32> to vector<16x256xf32>
    %92 = vector.extract_strided_slice %74 {offsets = [0, 18], sizes = [16, 256], strides = [1, 1]} : vector<16x290xf32> to vector<16x256xf32>
    %cst_24 = arith.constant 0.000000e+00 : f32
    %93 = vector.shape_cast %22 : vector<1x256xi1> to vector<1x256xi1>
    %94 = vector.broadcast %93 : vector<1x256xi1> to vector<16x256xi1>
    %95 = vector.broadcast %cst_24 : f32 to vector<16x256xf32>
    %96 = arith.select %94, %92, %95 : vector<16x256xi1>, vector<16x256xf32>
    %97 = vector.extract_strided_slice %74 {offsets = [0, 32], sizes = [16, 256], strides = [1, 1]} : vector<16x290xf32> to vector<16x256xf32>
    %cst_25 = arith.constant 0.000000e+00 : f32
    %98 = vector.shape_cast %20 : vector<1x256xi1> to vector<1x256xi1>
    %99 = vector.broadcast %98 : vector<1x256xi1> to vector<16x256xi1>
    %100 = vector.broadcast %cst_25 : f32 to vector<16x256xf32>
    %101 = arith.select %99, %97, %100 : vector<16x256xi1>, vector<16x256xf32>
    %102 = vector.extract_strided_slice %74 {offsets = [0, 33], sizes = [16, 256], strides = [1, 1]} : vector<16x290xf32> to vector<16x256xf32>
    %103 = vector.extract_strided_slice %74 {offsets = [0, 34], sizes = [16, 256], strides = [1, 1]} : vector<16x290xf32> to vector<16x256xf32>
    %cst_26 = arith.constant 0.000000e+00 : f32
    %104 = vector.shape_cast %22 : vector<1x256xi1> to vector<1x256xi1>
    %105 = vector.broadcast %104 : vector<1x256xi1> to vector<16x256xi1>
    %106 = vector.broadcast %cst_26 : f32 to vector<16x256xf32>
    %107 = arith.select %105, %103, %106 : vector<16x256xi1>, vector<16x256xf32>
    %108 = tpu.concatenate %79, %80, %85, %90, %91, %96, %101, %102, %107 in 0 : vector<16x256xf32>, vector<16x256xf32>, vector<16x256xf32>, vector<16x256xf32>, vector<16x256xf32>, vector<16x256xf32>, vector<16x256xf32>, vector<16x256xf32>, vector<16x256xf32> -> vector<144x256xf32>
    %c0_27 = arith.constant 0 : index
    %c0_28 = arith.constant 0 : index
    %109 = vector.load %arg4[%c0_27, %c0_28] : memref<16x144xf32, #tpu.memory_space<vmem>>, vector<16x144xf32>
    %cst_29 = arith.constant dense<0.000000e+00> : vector<16x256xf32>
    %110 = tpu.matmul %109, %108, %cst_29 {dimension_numbers = #tpu.dot_dimension_numbers<[1], [0], [0], [1], [0, 0, 1, 1], [], []>} : vector<16x144xf32>, vector<144x256xf32>, vector<16x256xf32> -> vector<16x256xf32>
    %c0_30 = arith.constant 0 : index
    %c0_31 = arith.constant 0 : index
    %111 = vector.load %arg5[%c0_30, %c0_31] : memref<16x1xf32, #tpu.memory_space<vmem>>, vector<16x1xf32>
    %112 = vector.broadcast %111 : vector<16x1xf32> to vector<16x256xf32>
    %113 = arith.addf %110, %112 : vector<16x256xf32>
    %114 = arith.addf %113, %1 : vector<16x256xf32>
    %cst_32 = arith.constant 0.000000e+00 : f32
    %115 = vector.broadcast %cst_32 : f32 to vector<16x256xf32>
    %116 = arith.maximumf %114, %115 : vector<16x256xf32>
    %cst_33 = arith.constant 0.000000e+00 : f32
    %117 = vector.broadcast %cst_33 : f32 to vector<16x256xf32>
    %118 = arith.minimumf %114, %117 : vector<16x256xf32>
    %119 = vector.broadcast %24 : f32 to vector<16x256xf32>
    %120 = arith.mulf %119, %118 : vector<16x256xf32>
    %121 = arith.addf %116, %120 : vector<16x256xf32>
    %c0_34 = arith.constant 0 : index
    %c0_35 = arith.constant 0 : index
    %c0_36 = arith.constant 0 : index
    %122 = vector.load %arg7[%c0_34, %c0_35, %c0_36] : memref<1x16x256xf32, #tpu.memory_space<vmem>>, vector<1x16x256xf32>
    %123 = vector.shape_cast %122 : vector<1x16x256xf32> to vector<16x256xf32>
    %124 = vector.shape_cast %121 : vector<16x256xf32> to vector<1x16x256xf32>
    tpu.vector_store %arg7[%c0_34, %c0_35, %c0_36], %124 {strides = array<i32>} : memref<1x16x256xf32, #tpu.memory_space<vmem>>, vector<1x16x256xf32>,
    return
  }
  func.func @transform_0(%arg0: i32) -> (i32, i32, i32) {
    %c0_i32 = arith.constant 0 : i32
    %c0_i32_0 = arith.constant 0 : i32
    %c0_i32_1 = arith.constant 0 : i32
    return %arg0, %c0_i32, %c0_i32_0 : i32, i32, i32
  }
  func.func @transform_1(%arg0: i32) -> (i32, i32) {
    %c0_i32 = arith.constant 0 : i32
    %c0_i32_0 = arith.constant 0 : i32
    %c0_i32_1 = arith.constant 0 : i32
    return %c0_i32, %c0_i32_0 : i32, i32
  }
  func.func @transform_2(%arg0: i32) -> (i32, i32) {
    %c0_i32 = arith.constant 0 : i32
    %c0_i32_0 = arith.constant 0 : i32
    %c0_i32_1 = arith.constant 0 : i32
    return %c0_i32, %c0_i32_0 : i32, i32
  }
  func.func @transform_3(%arg0: i32) -> (i32, i32) {
    %c0_i32 = arith.constant 0 : i32
    %c0_i32_0 = arith.constant 0 : i32
    %c0_i32_1 = arith.constant 0 : i32
    return %c0_i32, %c0_i32_0 : i32, i32
  }
  func.func @transform_4(%arg0: i32) -> (i32, i32) {
    %c0_i32 = arith.constant 0 : i32
    %c0_i32_0 = arith.constant 0 : i32
    %c0_i32_1 = arith.constant 0 : i32
    return %c0_i32, %c0_i32_0 : i32, i32
  }
  func.func @transform_5(%arg0: i32) -> i32 {
    %c0_i32 = arith.constant 0 : i32
    %c0_i32_0 = arith.constant 0 : i32
    return %c0_i32 : i32
  }
  func.func @transform_6(%arg0: i32) -> (i32, i32, i32) {
    %c0_i32 = arith.constant 0 : i32
    %c0_i32_0 = arith.constant 0 : i32
    %c0_i32_1 = arith.constant 0 : i32
    return %arg0, %c0_i32, %c0_i32_0 : i32, i32, i32
  }
}

</mosaic_0001>

<llo_original>
// kernel: normal_block_pallas.1
$region0: #{normal_block_pallas.1}
  #allocation0 [shape = 'u32[]', space=smem, size = 0x4, offset = 0x4, fixed_abs, tag = 'smem constant byte address 0x4 - core index']
  #allocation1 [shape = 'u32[144,128]{1,0:T(1,128)}', space=vmem, size = 0x12000, scoped, tag = 'internal scratch']
  %s0 = inlined_call_operand.vmem [shape: f32[2,16,256], index: 0, kind: input, shape index: {}]
  %s1 = inlined_call_operand.vmem [shape: f32[16,144], index: 1, kind: input, shape index: {}]
  %s2 = inlined_call_operand.vmem [shape: f32[16,1], index: 2, kind: input, shape index: {}]
  %s3 = inlined_call_operand.vmem [shape: f32[16,144], index: 3, kind: input, shape index: {}]
  %s4 = inlined_call_operand.vmem [shape: f32[16,1], index: 4, kind: input, shape index: {}]
  %s5 = inlined_call_operand.vmem [shape: f32[2], index: 5, kind: input, shape index: {}]
  %s6 = inlined_call_operand.vmem [shape: f32[2,16,256], index: 6, kind: output, shape index: {}]
  %s7 = sld [smem:[#allocation0]]
  $region61: #{normal_block_pallas.1} parent=0
    _
  %s9 = ssub.s32 1, %s7
  %s10 = scalar_select 0, %s9, %s7
  $region1: #{normal_block_pallas.1} parent=0
    #allocation2 [shape = 'u8[512]{0}', space=smem, size = 0x200, scoped, tag = 'input window, operand 5, single buffered']
    #allocation3 [shape = 's32[2]{0}', space=sflag, size = 0x8, scoped, tag = 'scoped memory for normal_block_pallas.1']
    %11 = vsyncpa [#allocation3], 0
    loop: start=0, step=1, limit=4
    $region2: #{normal_block_pallas.1} parent=1 // loop_pre_header
      _
    $region3: #{normal_block_pallas.1} parent=1 // loop_header
      %s13 = sphi 0, %s17
      %p14 = scmp.ge.s32.totalorder %s13, 4
      %s23 = sphi 0, %s25
      %s26 = sphi 0, %s23
      %s27 = sphi 0, %s26
      %s43 = sphi 0, %s27
      %s47 = sphi 0, %s47
      %s49 = sphi 0, %s47
      %s50 = sphi 0, %s49
      %s64 = sphi 0, %s50
      %s68 = sphi 0, %s68
      %s70 = sphi 0, %s68
      %s71 = sphi 0, %s70
      %s85 = sphi 0, %s71
      %s89 = sphi 0, %s89
      %s91 = sphi 0, %s89
      %s92 = sphi 0, %s91
      %s106 = sphi 0, %s92
      %s110 = sphi 0, %s110
      %s112 = sphi 0, %s110
      %s113 = sphi 0, %s112
      %s127 = sphi 0, %s113
      %s131 = sphi 0, %s131
      %s133 = sphi 0, %s131
      %s134 = sphi 0, %s133
      %s148 = sphi 0, %s134
      %s154 = sphi 0, %s156
      %s157 = sphi 0, %s154
      %s158 = sphi 0, %s157
      %s174 = sphi 0, %s158
    $region4: #{normal_block_pallas.1} parent=1 // loop_header_branch
      %16 = sbr.rel (%p14) target = $region8
    $region5: #{normal_block_pallas.1} parent=1 // loop_body
      %s18 = ssub.s32 %s13, 1
      %s19 = ssub.s32 %s13, 2
      %s20 = sadd.s32 %s13, 1
      %s21 = ssub.s32 %s13, %s20
      %p22 = scmp.eq.s32.totalorder %s21, 0
      %s24 = sadd.s32 %s23, 1
      %s25 = scalar_select %p22, %s23, %s24
      %p28 = pneg %p22
      %p29 = scmp.eq.s32.totalorder %s13, 1
      %p30 = por %p28, %p29
      %p31 = scmp.ne.s32.totalorder %s23, %s26
      %p32 = scmp.eq.s32.totalorder %s13, 0
      %p33 = por %p31, %p32
      %p34 = scmp.ne.s32.totalorder %s23, %s26
      %p35 = scmp.eq.s32.totalorder %s18, 1
      %p36 = por %p34, %p35
      %p37 = scmp.ne.s32.totalorder %s26, %s27
      %p38 = scmp.eq.s32.totalorder %s18, 0
      %p39 = por %p37, %p38
      %p40 = scmp.ne.s32.totalorder %s26, %s27
      %p41 = scmp.eq.s32.totalorder %s19, 1
      %p42 = por %p40, %p41
      %p44 = scmp.ne.s32.totalorder %s27, %s43
      %p45 = scmp.eq.s32.totalorder %s19, 0
      %p46 = por %p44, %p45
      %s48 = sadd.s32 %s47, 1
      %p51 = scmp.eq.s32.totalorder %s13, 1
      %p52 = scmp.ne.s32.totalorder %s47, %s49
      %p53 = scmp.eq.s32.totalorder %s13, 0
      %p54 = por %p52, %p53
      %p55 = scmp.ne.s32.totalorder %s47, %s49
      %p56 = scmp.eq.s32.totalorder %s18, 1
      %p57 = por %p55, %p56
      %p58 = scmp.ne.s32.totalorder %s49, %s50
      %p59 = scmp.eq.s32.totalorder %s18, 0
      %p60 = por %p58, %p59
      %p61 = scmp.ne.s32.totalorder %s49, %s50
      %p62 = scmp.eq.s32.totalorder %s19, 1
      %p63 = por %p61, %p62
      %p65 = scmp.ne.s32.totalorder %s50, %s64
      %p66 = scmp.eq.s32.totalorder %s19, 0
      %p67 = por %p65, %p66
      %s69 = sadd.s32 %s68, 1
      %p72 = scmp.eq.s32.totalorder %s13, 1
      %p73 = scmp.ne.s32.totalorder %s68, %s70
      %p74 = scmp.eq.s32.totalorder %s13, 0
      %p75 = por %p73, %p74
      %p76 = scmp.ne.s32.totalorder %s68, %s70
      %p77 = scmp.eq.s32.totalorder %s18, 1
      %p78 = por %p76, %p77
      %p79 = scmp.ne.s32.totalorder %s70, %s71
      %p80 = scmp.eq.s32.totalorder %s18, 0
      %p81 = por %p79, %p80
      %p82 = scmp.ne.s32.totalorder %s70, %s71
      %p83 = scmp.eq.s32.totalorder %s19, 1
      %p84 = por %p82, %p83
      %p86 = scmp.ne.s32.totalorder %s71, %s85
      %p87 = scmp.eq.s32.totalorder %s19, 0
      %p88 = por %p86, %p87
      %s90 = sadd.s32 %s89, 1
      %p93 = scmp.eq.s32.totalorder %s13, 1
      %p94 = scmp.ne.s32.totalorder %s89, %s91
      %p95 = scmp.eq.s32.totalorder %s13, 0
      %p96 = por %p94, %p95
      %p97 = scmp.ne.s32.totalorder %s89, %s91
      %p98 = scmp.eq.s32.totalorder %s18, 1
      %p99 = por %p97, %p98
      %p100 = scmp.ne.s32.totalorder %s91, %s92
      %p101 = scmp.eq.s32.totalorder %s18, 0
      %p102 = por %p100, %p101
      %p103 = scmp.ne.s32.totalorder %s91, %s92
      %p104 = scmp.eq.s32.totalorder %s19, 1
      %p105 = por %p103, %p104
      %p107 = scmp.ne.s32.totalorder %s92, %s106
      %p108 = scmp.eq.s32.totalorder %s19, 0
      %p109 = por %p107, %p108
      %s111 = sadd.s32 %s110, 1
      %p114 = scmp.eq.s32.totalorder %s13, 1
      %p115 = scmp.ne.s32.totalorder %s110, %s112
      %p116 = scmp.eq.s32.totalorder %s13, 0
      %p117 = por %p115, %p116
      %p118 = scmp.ne.s32.totalorder %s110, %s112
      %p119 = scmp.eq.s32.totalorder %s18, 1
      %p120 = por %p118, %p119
      %p121 = scmp.ne.s32.totalorder %s112, %s113
      %p122 = scmp.eq.s32.totalorder %s18, 0
      %p123 = por %p121, %p122
      %p124 = scmp.ne.s32.totalorder %s112, %s113
      %p125 = scmp.eq.s32.totalorder %s19, 1
      %p126 = por %p124, %p125
      %p128 = scmp.ne.s32.totalorder %s113, %s127
      %p129 = scmp.eq.s32.totalorder %s19, 0
      %p130 = por %p128, %p129
      %s132 = sadd.s32 %s131, 1
      %p135 = scmp.eq.s32.totalorder %s13, 1
      %p136 = scmp.ne.s32.totalorder %s131, %s133
      %p137 = scmp.eq.s32.totalorder %s13, 0
      %p138 = por %p136, %p137
      %p139 = scmp.ne.s32.totalorder %s131, %s133
      %p140 = scmp.eq.s32.totalorder %s18, 1
      %p141 = por %p139, %p140
      %p142 = scmp.ne.s32.totalorder %s133, %s134
      %p143 = scmp.eq.s32.totalorder %s18, 0
      %p144 = por %p142, %p143
      %p145 = scmp.ne.s32.totalorder %s133, %s134
      %p146 = scmp.eq.s32.totalorder %s19, 1
      %p147 = por %p145, %p146
      %p149 = scmp.ne.s32.totalorder %s134, %s148
      %p150 = scmp.eq.s32.totalorder %s19, 0
      %p151 = por %p149, %p150
      %s152 = ssub.s32 %s13, %s20
      %p153 = scmp.eq.s32.totalorder %s152, 0
      %s155 = sadd.s32 %s154, 1
      %s156 = scalar_select %p153, %s154, %s155
      %p159 = pneg %p153
      %p160 = scmp.eq.s32.totalorder %s13, 1
      %p161 = por %p159, %p160
      %p162 = scmp.ne.s32.totalorder %s154, %s157
      %p163 = scmp.eq.s32.totalorder %s13, 0
      %p164 = por %p162, %p163
      %p165 = scmp.ne.s32.totalorder %s154, %s157
      %p166 = scmp.eq.s32.totalorder %s18, 1
      %p167 = por %p165, %p166
      %p168 = scmp.ne.s32.totalorder %s157, %s158
      %p169 = scmp.eq.s32.totalorder %s18, 0
      %p170 = por %p168, %p169
      %p171 = scmp.ne.s32.totalorder %s157, %s158
      %p172 = scmp.eq.s32.totalorder %s19, 1
      %p173 = por %p171, %p172
      %p175 = scmp.ne.s32.totalorder %s158, %s174
      %p176 = scmp.eq.s32.totalorder %s19, 0
      %p177 = por %p175, %p176
      %p178 = scmp.le.s32.totalorder 1, %s13
      %p179 = scmp.lt.s32.totalorder %s13, 3
      %p180 = pnand %p178, %p179
      %p181 = pneg %p180
      // Predicated region
      $region9: #{normal_block_pallas.1} parent=5 // pred_check
        _
      $region10: #{normal_block_pallas.1} parent=5 // pred_check_branch
        %183 = sbr.rel (%p180) target = $region12
      $region11: #{normal_block_pallas.1} parent=5 // pred_region
        %s184 = ssub.s32 %s13, 1
        // Predicated region
        $region13: #{normal_block_pallas.1} parent=11 // pred_check
          %p185 = pneg %p60
        $region14: #{normal_block_pallas.1} parent=11 // pred_check_branch
          %187 = sbr.rel (%p185) target = $region16
        $region15: #{normal_block_pallas.1} parent=11 // pred_region
          _
        $region16: #{normal_block_pallas.1} parent=11 // pred_fallthru
          _
        // Predicated region
        $region17: #{normal_block_pallas.1} parent=11 // pred_check
          %p188 = pneg %p81
        $region18: #{normal_block_pallas.1} parent=11 // pred_check_branch
          %190 = sbr.rel (%p188) target = $region20
        $region19: #{normal_block_pallas.1} parent=11 // pred_region
          _
        $region20: #{normal_block_pallas.1} parent=11 // pred_fallthru
          _
        // Predicated region
        $region21: #{normal_block_pallas.1} parent=11 // pred_check
          %p191 = pneg %p102
        $region22: #{normal_block_pallas.1} parent=11 // pred_check_branch
          %193 = sbr.rel (%p191) target = $region24
        $region23: #{normal_block_pallas.1} parent=11 // pred_region
          _
        $region24: #{normal_block_pallas.1} parent=11 // pred_fallthru
          _
        // Predicated region
        $region25: #{normal_block_pallas.1} parent=11 // pred_check
          %p194 = pneg %p123
        $region26: #{normal_block_pallas.1} parent=11 // pred_check_branch
          %196 = sbr.rel (%p194) target = $region28
        $region27: #{normal_block_pallas.1} parent=11 // pred_region
          _
        $region28: #{normal_block_pallas.1} parent=11 // pred_fallthru
          _
        // Predicated region
        $region29: #{normal_block_pallas.1} parent=11 // pred_check
          %p197 = pneg %p144
        $region30: #{normal_block_pallas.1} parent=11 // pred_check_branch
          %199 = sbr.rel (%p197) target = $region32
        $region31: #{normal_block_pallas.1} parent=11 // pred_region
          %s201 = ssub.s32 16, 16
          %202 = vsyncadd [#allocation3], %s201
          %s204 = sshll.u32 %s5, 4
          %s205 = int_to_ptr.vmem [resolvable:$true] %s204
          %207 = dma.vmem_to_smem %s205, 16, [#allocation2], [#allocation3]
        $region32: #{normal_block_pallas.1} parent=11 // pred_fallthru
          _
      $region12: #{normal_block_pallas.1} parent=5 // pred_fallthru
        _
      %p208 = scmp.lt.s32.totalorder %s13, 2
      // Predicated region
      $region33: #{normal_block_pallas.1} parent=5 // pred_check
        %p209 = pneg %p208
      $region34: #{normal_block_pallas.1} parent=5 // pred_check_branch
        %211 = sbr.rel (%p209) target = $region36
      $region35: #{normal_block_pallas.1} parent=5 // pred_region
        // Predicated region
        $region37: #{normal_block_pallas.1} parent=35 // pred_check
          %p212 = pneg %p33
        $region38: #{normal_block_pallas.1} parent=35 // pred_check_branch
          %214 = sbr.rel (%p212) target = $region40
        $region39: #{normal_block_pallas.1} parent=35 // pred_region
          %p215 = scmp.lt.s32.totalorder %s13, 1
          %s216 = scalar_select %p215, %s13, 1
          %s217 = smul.addr %s216, 4
          %s218 = smul.addr %s217, 8
          %s219 = scalar_lea.vmem %s0, %s218
        $region40: #{normal_block_pallas.1} parent=35 // pred_fallthru
          _
      $region36: #{normal_block_pallas.1} parent=5 // pred_fallthru
        _
      %p220 = scmp.le.s32.totalorder 1, %s13
      %p221 = scmp.lt.s32.totalorder %s13, 3
      %p222 = pnand %p220, %p221
      %p223 = pneg %p222
      // Predicated region
      $region41: #{normal_block_pallas.1} parent=5 // pred_check
        _
      $region42: #{normal_block_pallas.1} parent=5 // pred_check_branch
        %225 = sbr.rel (%p222) target = $region44
      $region43: #{normal_block_pallas.1} parent=5 // pred_region
        %s226 = ssub.s32 %s13, 1
        // Predicated region
        $region45: #{normal_block_pallas.1} parent=43 // pred_check
          %p227 = pneg %p144
        $region46: #{normal_block_pallas.1} parent=43 // pred_check_branch
          %229 = sbr.rel (%p227) target = $region48
        $region47: #{normal_block_pallas.1} parent=43 // pred_region
          %230 = dma.done [#allocation3], 16
        $region48: #{normal_block_pallas.1} parent=43 // pred_fallthru
          _
        %231 = sfence
        %p232 = scmp.lt.s32.totalorder %s18, 1
        %s233 = scalar_select %p232, %s18, 1
        %s234 = smul.addr %s233, 4
        %s235 = smul.addr %s234, 8
        %s236 = scalar_lea.vmem %s0, %s235
        %p237 = pneg %p39
        %p238 = pneg %p36
        %p239 = pneg %p60
        %p240 = pneg %p57
        %p241 = pneg %p81
        %p242 = pneg %p78
        %p243 = pneg %p102
        %p244 = pneg %p99
        %p245 = pneg %p123
        %p246 = pneg %p120
        %p247 = pneg %p144
        %p248 = pneg %p141
        %p249 = pneg %p170
        %p250 = pneg %p167
        %p251 = scmp.lt.s32.totalorder %s18, 1
        %s252 = scalar_select %p251, %s18, 1
        %s253 = smul.addr %s252, 4
        %s254 = smul.addr %s253, 8
        %s255 = scalar_lea.vmem %s6, %s254
        %p256 = scmp.lt.s32.totalorder %s18, 1
        %s257 = scalar_select %p256, %s18, 1
        %s258 = smul.addr %s257, 4
        %s259 = smul.addr %s258, 8
        %s260 = scalar_lea.vmem %s0, %s259
        %p261 = scmp.lt.s32.totalorder %s18, 1
        %s262 = scalar_select %p261, %s18, 1
        %s263 = smul.addr %s262, 4
        %s264 = smul.addr %s263, 8
        %s265 = scalar_lea.vmem %s6, %s264
        %v266 = vld [vmem:[%s260] sm:$0xff]
        %v267 = vld [vmem:[%s260 + $0x8] sm:$0xff]
        %v268 = vld [vmem:[%s260 + $0x10] sm:$0xff]
        %v269 = vld [vmem:[%s260 + $0x18] sm:$0xff]
        %v270 = vlaneseq
        %v271 = vand.u32 %v270, 127
        %v272 = vadd.s32 %v271, 128
        %vm273 = vcmp.lt.s32.totalorder %v271, 0
        %v274 = vsub.s32 0, %v271
        %v275 = vsel %vm273, %v274, %v271
        %v276 = vshrl.u32 %v275, 4
        %v277 = vand.u32 %v275, 15
        %v278 = vsub.s32 0, %v277
        %v279 = vsel %vm273, %v278, %v277
        %vm280 = vcmp.lt.s32.totalorder %v272, 0
        %v281 = vsub.s32 0, %v272
        %v282 = vsel %vm280, %v281, %v272
        %v283 = vshrl.u32 %v282, 4
        %v284 = vand.u32 %v282, 15
        %v285 = vsub.s32 0, %v284
        %v286 = vsel %vm280, %v285, %v284
        %vm287 = vcmp.ne.s32.totalorder %v279, 0
        %vm288 = vcmp.ne.s32.totalorder %v286, 0
        %vm289 = vcmp.lt.s32.totalorder %v279, 0
        %vm290 = vcmp.lt.s32.totalorder %v286, 0
        %vm291 = vmand %vm289, %vm287
        %vm292 = vmand %vm290, %vm288
        %v293 = vadd.s32 %v279, 16
        %v294 = vadd.s32 %v286, 16
        %v295 = vsel %vm291, %v293, %v279
        %v296 = vsel %vm292, %v294, %v286
        %vm297 = vcmp.ne.s32.totalorder %v295, 0
        %vm298 = vcmp.ne.s32.totalorder %v296, 0
        %vm299 = vcmp.ne.s32.totalorder %v295, 15
        %vm300 = vcmp.ne.s32.totalorder %v296, 15
        %s301 = sld [smem:[#allocation2]]
        %s302 = sld [smem:[#allocation2 + $0x1]]
        %307 = vrot.lane.b32.xlu0 %v266, 17
        %v308 = vpop.permute.xlu0 %307
        %309 = vrot.lane.b32.xlu0 %v267, 17
        %v310 = vpop.permute.xlu0 %309
        %311 = vrot.lane.b32.xlu0 %v268, 17
        %v312 = vpop.permute.xlu0 %311
        %313 = vrot.lane.b32.xlu0 %v269, 17
        %v314 = vpop.permute.xlu0 %313
        %vm315 = vcmask 138240
        %v316 = vsel %vm315, %v308, %v310
        %v317 = vsel %vm315, %v312, %v314
        %v324 = vsel %vm315, 0.0, %v308
        %v325 = vsel %vm315, 0.0, %v312
        %v326 = vsel %vm315, %v310, 0.0
        %v327 = vsel %vm315, %v314, 0.0
        %v328 = vsel %vm297, 1, 0
        %v329 = vsel %vm298, 1, 0
        %vm330 = vcmp.eq.s32.totalorder %v328, 1
        %vm331 = vcmp.eq.s32.totalorder %v329, 1
        %v332 = vsel %vm330, %v324, 0.0
        %v333 = vsel %vm331, %v316, 0.0
        %v334 = vsel %vm330, %v325, 0.0
        %v335 = vsel %vm331, %v317, 0.0
        %v336 = vsel %vm299, 1, 0
        %v337 = vsel %vm300, 1, 0
        %vm338 = vcmp.eq.s32.totalorder %v336, 1
        %vm339 = vcmp.eq.s32.totalorder %v337, 1
        %344 = vrot.lane.b32.xlu0 %v324, 126
        %v345 = vpop.permute.xlu0 %344
        %346 = vrot.lane.b32.xlu0 %v316, 126
        %v347 = vpop.permute.xlu0 %346
        %348 = vrot.lane.b32.xlu0 %v326, 126
        %v349 = vpop.permute.xlu0 %348
        %350 = vrot.lane.b32.xlu0 %v325, 126
        %v351 = vpop.permute.xlu0 %350
        %352 = vrot.lane.b32.xlu0 %v317, 126
        %v353 = vpop.permute.xlu0 %352
        %354 = vrot.lane.b32.xlu0 %v327, 126
        %v355 = vpop.permute.xlu0 %354
        %vm356 = vcmask 1031168
        %v357 = vsel %vm356, %v345, %v347
        %v358 = vsel %vm356, %v347, %v349
        %v359 = vsel %vm356, %v351, %v353
        %v360 = vsel %vm356, %v353, %v355
        %v365 = vsel %vm338, %v357, 0.0
        %v366 = vsel %vm339, %v358, 0.0
        %v367 = vsel %vm338, %v359, 0.0
        %v368 = vsel %vm339, %v360, 0.0
        %369 = vrot.lane.b32.xlu0 %v324, 112
        %v370 = vpop.permute.xlu0 %369
        %371 = vrot.lane.b32.xlu0 %v316, 112
        %v372 = vpop.permute.xlu0 %371
        %373 = vrot.lane.b32.xlu0 %v326, 112
        %v374 = vpop.permute.xlu0 %373
        %375 = vrot.lane.b32.xlu0 %v325, 112
        %v376 = vpop.permute.xlu0 %375
        %377 = vrot.lane.b32.xlu0 %v317, 112
        %v378 = vpop.permute.xlu0 %377
        %379 = vrot.lane.b32.xlu0 %v327, 112
        %v380 = vpop.permute.xlu0 %379
        %vm381 = vcmask 916480
        %v382 = vsel %vm381, %v370, %v372
        %v383 = vsel %vm381, %v372, %v374
        %v384 = vsel %vm381, %v376, %v378
        %v385 = vsel %vm381, %v378, %v380
        %v390 = vsel %vm330, %v382, 0.0
        %v391 = vsel %vm331, %v383, 0.0
        %v392 = vsel %vm330, %v384, 0.0
        %v393 = vsel %vm331, %v385, 0.0
        %394 = vrot.lane.b32.xlu0 %v324, 110
        %v395 = vpop.permute.xlu0 %394
        %396 = vrot.lane.b32.xlu0 %v316, 110
        %v397 = vpop.permute.xlu0 %396
        %398 = vrot.lane.b32.xlu0 %v326, 110
        %v399 = vpop.permute.xlu0 %398
        %400 = vrot.lane.b32.xlu0 %v325, 110
        %v401 = vpop.permute.xlu0 %400
        %402 = vrot.lane.b32.xlu0 %v317, 110
        %v403 = vpop.permute.xlu0 %402
        %404 = vrot.lane.b32.xlu0 %v327, 110
        %v405 = vpop.permute.xlu0 %404
        %vm406 = vcmask 900096
        %v407 = vsel %vm406, %v395, %v397
        %v408 = vsel %vm406, %v397, %v399
        %v409 = vsel %vm406, %v401, %v403
        %v410 = vsel %vm406, %v403, %v405
        %v415 = vsel %vm338, %v407, 0.0
        %v416 = vsel %vm339, %v408, 0.0
        %v417 = vsel %vm338, %v409, 0.0
        %v418 = vsel %vm339, %v410, 0.0
        %419 = vrot.lane.b32.xlu0 %v324, 96
        %v420 = vpop.permute.xlu0 %419
        %421 = vrot.lane.b32.xlu0 %v316, 96
        %v422 = vpop.permute.xlu0 %421
        %423 = vrot.lane.b32.xlu0 %v326, 96
        %v424 = vpop.permute.xlu0 %423
        %425 = vrot.lane.b32.xlu0 %v325, 96
        %v426 = vpop.permute.xlu0 %425
        %427 = vrot.lane.b32.xlu0 %v317, 96
        %v428 = vpop.permute.xlu0 %427
        %429 = vrot.lane.b32.xlu0 %v327, 96
        %v430 = vpop.permute.xlu0 %429
        %vm431 = vcmask 785408
        %v432 = vsel %vm431, %v420, %v422
        %v433 = vsel %vm431, %v422, %v424
        %v434 = vsel %vm431, %v426, %v428
        %v435 = vsel %vm431, %v428, %v430
        %v440 = vsel %vm330, %v432, 0.0
        %v441 = vsel %vm331, %v433, 0.0
        %v442 = vsel %vm330, %v434, 0.0
        %v443 = vsel %vm331, %v435, 0.0
        %444 = vrot.lane.b32.xlu0 %v324, 94
        %v445 = vpop.permute.xlu0 %444
        %446 = vrot.lane.b32.xlu0 %v316, 94
        %v447 = vpop.permute.xlu0 %446
        %448 = vrot.lane.b32.xlu0 %v326, 94
        %v449 = vpop.permute.xlu0 %448
        %450 = vrot.lane.b32.xlu0 %v325, 94
        %v451 = vpop.permute.xlu0 %450
        %452 = vrot.lane.b32.xlu0 %v317, 94
        %v453 = vpop.permute.xlu0 %452
        %454 = vrot.lane.b32.xlu0 %v327, 94
        %v455 = vpop.permute.xlu0 %454
        %vm456 = vcmask 769024
        %v457 = vsel %vm456, %v445, %v447
        %v458 = vsel %vm456, %v447, %v449
        %v459 = vsel %vm456, %v451, %v453
        %v460 = vsel %vm456, %v453, %v455
        %v465 = vsel %vm338, %v457, 0.0
        %v466 = vsel %vm339, %v458, 0.0
        %v467 = vsel %vm338, %v459, 0.0
        %v468 = vsel %vm339, %v460, 0.0
        %469 = vrot.lane.b32.xlu0 %v324, 127
        %v470 = vpop.permute.xlu0 %469
        %471 = vrot.lane.b32.xlu0 %v316, 127
        %v472 = vpop.permute.xlu0 %471
        %473 = vrot.lane.b32.xlu0 %v326, 127
        %v474 = vpop.permute.xlu0 %473
        %475 = vrot.lane.b32.xlu0 %v325, 127
        %v476 = vpop.permute.xlu0 %475
        %477 = vrot.lane.b32.xlu0 %v317, 127
        %v478 = vpop.permute.xlu0 %477
        %479 = vrot.lane.b32.xlu0 %v327, 127
        %v480 = vpop.permute.xlu0 %479
        %vm481 = vcmask 1039360
        %v482 = vsel %vm481, %v470, %v472
        %v483 = vsel %vm481, %v472, %v474
        %v484 = vsel %vm481, %v476, %v478
        %v485 = vsel %vm481, %v478, %v480
        %490 = vrot.lane.b32.xlu0 %v324, 111
        %v491 = vpop.permute.xlu0 %490
        %492 = vrot.lane.b32.xlu0 %v316, 111
        %v493 = vpop.permute.xlu0 %492
        %494 = vrot.lane.b32.xlu0 %v326, 111
        %v495 = vpop.permute.xlu0 %494
        %496 = vrot.lane.b32.xlu0 %v325, 111
        %v497 = vpop.permute.xlu0 %496
        %498 = vrot.lane.b32.xlu0 %v317, 111
        %v499 = vpop.permute.xlu0 %498
        %500 = vrot.lane.b32.xlu0 %v327, 111
        %v501 = vpop.permute.xlu0 %500
        %vm502 = vcmask 908288
        %v503 = vsel %vm502, %v491, %v493
        %v504 = vsel %vm502, %v493, %v495
        %v505 = vsel %vm502, %v497, %v499
        %v506 = vsel %vm502, %v499, %v501
        %511 = vrot.lane.b32.xlu0 %v324, 95
        %v512 = vpop.permute.xlu0 %511
        %513 = vrot.lane.b32.xlu0 %v316, 95
        %v514 = vpop.permute.xlu0 %513
        %515 = vrot.lane.b32.xlu0 %v326, 95
        %v516 = vpop.permute.xlu0 %515
        %517 = vrot.lane.b32.xlu0 %v325, 95
        %v518 = vpop.permute.xlu0 %517
        %519 = vrot.lane.b32.xlu0 %v317, 95
        %v520 = vpop.permute.xlu0 %519
        %521 = vrot.lane.b32.xlu0 %v327, 95
        %v522 = vpop.permute.xlu0 %521
        %vm523 = vcmask 777216
        %v524 = vsel %vm523, %v512, %v514
        %v525 = vsel %vm523, %v514, %v516
        %v526 = vsel %vm523, %v518, %v520
        %v527 = vsel %vm523, %v520, %v522
        %v532 = vld [vmem:[%s1] sm:$0xff]
        %v533 = vld [vmem:[%s1 + $0x8] sm:$0xff]
        %v534 = vld [vmem:[%s1 + $0x10] sm:$0xff]
        %v535 = vld [vmem:[%s1 + $0x18] sm:$0xff]
        %v536 = vld [vmem:[%s2] sm:$0xff]
        %v537 = vld [vmem:[%s2 + $0x8] sm:$0xff]
        %539 = vset.pattern.permute.xlu0 0
        %540 = vperm.xlu0 %539, %v536
        %v541 = vpop.permute.xlu0 %540
        %544 = vset.pattern.permute.xlu0 0
        %545 = vperm.xlu0 %544, %v537
        %v546 = vpop.permute.xlu0 %545
        %vm548 = vcmask 130048
        %v550 = vsel %vm548, %v533, 0
        %v553 = vsel %vm548, %v535, 0
        %555 = vmatprep.subr.mxu0 %v527
        %556 = vmatpush1.msra.mxu0 %v526
        %557 = vmatprep.subr.mxu0 %v525
        %558 = vmatpush1.msra.mxu0 %v524
        %559 = vmatprep.subr.mxu0 %v443
        %560 = vmatpush1.msra.mxu0 %v442
        %561 = vmatprep.subr.mxu0 %v441
        %562 = vmatpush1.msra.mxu0 %v440
        %563 = vmatprep.subr.mxu0 %v418
        %564 = vmatpush1.msra.mxu0 %v417
        %565 = vmatprep.subr.mxu0 %v416
        %566 = vmatpush1.msra.mxu0 %v415
        %567 = vmatprep.subr.mxu0 %v506
        %568 = vmatpush1.msra.mxu0 %v505
        %569 = vmatprep.subr.mxu0 %v504
        %570 = vmatpush1.msra.mxu0 %v503
        %571 = vmatprep.subr.mxu0 %v393
        %572 = vmatpush1.msra.mxu0 %v392
        %573 = vmatprep.subr.mxu0 %v391
        %574 = vmatpush1.msra.mxu0 %v390
        %575 = vmatprep.subr.mxu0 %v368
        %576 = vmatpush1.msra.mxu0 %v367
        %577 = vmatprep.subr.mxu0 %v366
        %578 = vmatpush1.msra.mxu0 %v365
        %579 = vmatprep.subr.mxu0 %v485
        %580 = vmatpush1.msra.mxu0 %v484
        %581 = vmatprep.subr.mxu0 %v483
        %582 = vmatpush1.msra.mxu0 %v482
        %583 = vmatprep.subr.mxu0 %v335
        %584 = vmatpush1.msra.mxu0 %v334
        %585 = vmatprep.subr.mxu0 %v333
        %586 = vmatpush1.msra.mxu0 %v332
        %587 = vmatprep.subr.mxu0 0.0
        %588 = vmatpush2.msra.mxu0 0.0
        %589 = vmatprep.subr.mxu0 0.0
        %590 = vmatpush2.msra.mxu0 0.0
        %591 = vmatprep.subr.mxu0 0.0
        %592 = vmatpush2.msra.mxu0 0.0
        %593 = vmatprep.subr.mxu0 0.0
        %594 = vmatpush2.msra.mxu0 0.0
        %595 = vmatprep.subr.mxu0 0.0
        %596 = vmatpush2.msra.mxu0 0.0
        %597 = vmatprep.subr.mxu0 0.0
        %598 = vmatpush2.msra.mxu0 0.0
        %599 = vmatprep.subr.mxu0 0.0
        %600 = vmatpush2.msra.mxu0 0.0
        %601 = vmatprep.subr.mxu0 0.0
        %602 = vmatpush2.msra.mxu0 0.0
        %603 = vmatprep.subr.mxu0 0.0
        %604 = vmatpush2.msra.mxu0 0.0
        %605 = vmatprep.subr.mxu0 0.0
        %606 = vmatpush2.msra.mxu0 0.0
        %607 = vmatprep.subr.mxu0 0.0
        %608 = vmatpush2.msra.mxu0 0.0
        %609 = vmatprep.subr.mxu0 0.0
        %610 = vmatpush2.msra.mxu0 0.0
        %611 = vmatprep.subr.mxu0 0.0
        %612 = vmatpush2.msra.mxu0 0.0
        %613 = vmatprep.subr.mxu0 0.0
        %614 = vmatpush2.msra.mxu0 0.0
        %615 = vmatprep.subr.mxu0 %v468
        %616 = vmatpush2.msra.mxu0 %v467
        %617 = vmatprep.subr.mxu0 %v466
        %618 = vmatpush2.msra.mxu0 %v465
        %619 = vmatprep.mubr.f32.mxu0 %v550
        %620 = vmatmul.mubr.f32.gmra.mxu0 %v532
        %v621 = vpop.f32.mrf.mxu0
        %v622 = vadd.f32 %v541, %v621
        %v623 = vpop.f32.mrf.mxu0
        %v624 = vadd.f32 %v541, %v623
        %625 = vmatprep.mubr.f32.mxu0 %v553
        %626 = vmatmul.mubr.f32.gmra.mxu0 %v534
        %v627 = vpop.f32.mrf.mxu0
        %v628 = vadd.f32 %v546, %v627
        %v629 = vpop.f32.mrf.mxu0
        %v630 = vadd.f32 %v546, %v629
        %631 = vdwg.mxu0
        %v632 = vmax.f32 %v622, 0.0
        %v633 = vmax.f32 %v624, 0.0
        %v634 = vmax.f32 %v628, 0.0
        %v635 = vmax.f32 %v630, 0.0
        %v636 = vmin.f32 %v622, 0.0
        %v637 = vmin.f32 %v624, 0.0
        %v638 = vmin.f32 %v628, 0.0
        %v639 = vmin.f32 %v630, 0.0
        %v640 = vstv %s301
        %v641 = vmul.f32 %v640, %v636
        %v642 = vmul.f32 %v640, %v637
        %v643 = vmul.f32 %v640, %v638
        %v644 = vmul.f32 %v640, %v639
        %v645 = vadd.f32 %v632, %v641
        %v646 = vadd.f32 %v633, %v642
        %v647 = vadd.f32 %v634, %v643
        %v648 = vadd.f32 %v635, %v644
        %653 = vrot.lane.b32.xlu0 %v645, 17
        %v654 = vpop.permute.xlu0 %653
        %655 = vrot.lane.b32.xlu0 %v646, 17
        %v656 = vpop.permute.xlu0 %655
        %657 = vrot.lane.b32.xlu0 %v647, 17
        %v658 = vpop.permute.xlu0 %657
        %659 = vrot.lane.b32.xlu0 %v648, 17
        %v660 = vpop.permute.xlu0 %659
        %v661 = vsel %vm315, %v654, %v656
        %v662 = vsel %vm315, %v658, %v660
        %v669 = vsel %vm315, 0.0, %v654
        %v670 = vsel %vm315, 0.0, %v658
        %v671 = vsel %vm315, %v656, 0.0
        %v672 = vsel %vm315, %v660, 0.0
        %v673 = vsel %vm330, %v669, 0.0
        %v674 = vsel %vm331, %v661, 0.0
        %v675 = vsel %vm330, %v670, 0.0
        %v676 = vsel %vm331, %v662, 0.0
        %681 = vrot.lane.b32.xlu0 %v669, 126
        %v682 = vpop.permute.xlu0 %681
        %683 = vrot.lane.b32.xlu0 %v661, 126
        %v684 = vpop.permute.xlu0 %683
        %685 = vrot.lane.b32.xlu0 %v671, 126
        %v686 = vpop.permute.xlu0 %685
        %687 = vrot.lane.b32.xlu0 %v670, 126
        %v688 = vpop.permute.xlu0 %687
        %689 = vrot.lane.b32.xlu0 %v662, 126
        %v690 = vpop.permute.xlu0 %689
        %691 = vrot.lane.b32.xlu0 %v672, 126
        %v692 = vpop.permute.xlu0 %691
        %v693 = vsel %vm356, %v682, %v684
        %v694 = vsel %vm356, %v684, %v686
        %v695 = vsel %vm356, %v688, %v690
        %v696 = vsel %vm356, %v690, %v692
        %v701 = vsel %vm338, %v693, 0.0
        %v702 = vsel %vm339, %v694, 0.0
        %v703 = vsel %vm338, %v695, 0.0
        %v704 = vsel %vm339, %v696, 0.0
        %705 = vrot.lane.b32.xlu0 %v669, 112
        %v706 = vpop.permute.xlu0 %705
        %707 = vrot.lane.b32.xlu0 %v661, 112
        %v708 = vpop.permute.xlu0 %707
        %709 = vrot.lane.b32.xlu0 %v671, 112
        %v710 = vpop.permute.xlu0 %709
        %711 = vrot.lane.b32.xlu0 %v670, 112
        %v712 = vpop.permute.xlu0 %711
        %713 = vrot.lane.b32.xlu0 %v662, 112
        %v714 = vpop.permute.xlu0 %713
        %715 = vrot.lane.b32.xlu0 %v672, 112
        %v716 = vpop.permute.xlu0 %715
        %v717 = vsel %vm381, %v706, %v708
        %v718 = vsel %vm381, %v708, %v710
        %v719 = vsel %vm381, %v712, %v714
        %v720 = vsel %vm381, %v714, %v716
        %v725 = vsel %vm330, %v717, 0.0
        %v726 = vsel %vm331, %v718, 0.0
        %v727 = vsel %vm330, %v719, 0.0
        %v728 = vsel %vm331, %v720, 0.0
        %729 = vrot.lane.b32.xlu0 %v669, 110
        %v730 = vpop.permute.xlu0 %729
        %731 = vrot.lane.b32.xlu0 %v661, 110
        %v732 = vpop.permute.xlu0 %731
        %733 = vrot.lane.b32.xlu0 %v671, 110
        %v734 = vpop.permute.xlu0 %733
        %735 = vrot.lane.b32.xlu0 %v670, 110
        %v736 = vpop.permute.xlu0 %735
        %737 = vrot.lane.b32.xlu0 %v662, 110
        %v738 = vpop.permute.xlu0 %737
        %739 = vrot.lane.b32.xlu0 %v672, 110
        %v740 = vpop.permute.xlu0 %739
        %v741 = vsel %vm406, %v730, %v732
        %v742 = vsel %vm406, %v732, %v734
        %v743 = vsel %vm406, %v736, %v738
        %v744 = vsel %vm406, %v738, %v740
        %v749 = vsel %vm338, %v741, 0.0
        %v750 = vsel %vm339, %v742, 0.0
        %v751 = vsel %vm338, %v743, 0.0
        %v752 = vsel %vm339, %v744, 0.0
        %753 = vrot.lane.b32.xlu0 %v669, 96
        %v754 = vpop.permute.xlu0 %753
        %755 = vrot.lane.b32.xlu0 %v661, 96
        %v756 = vpop.permute.xlu0 %755
        %757 = vrot.lane.b32.xlu0 %v671, 96
        %v758 = vpop.permute.xlu0 %757
        %759 = vrot.lane.b32.xlu0 %v670, 96
        %v760 = vpop.permute.xlu0 %759
        %761 = vrot.lane.b32.xlu0 %v662, 96
        %v762 = vpop.permute.xlu0 %761
        %763 = vrot.lane.b32.xlu0 %v672, 96
        %v764 = vpop.permute.xlu0 %763
        %v765 = vsel %vm431, %v754, %v756
        %v766 = vsel %vm431, %v756, %v758
        %v767 = vsel %vm431, %v760, %v762
        %v768 = vsel %vm431, %v762, %v764
        %v773 = vsel %vm330, %v765, 0.0
        %v774 = vsel %vm331, %v766, 0.0
        %v775 = vsel %vm330, %v767, 0.0
        %v776 = vsel %vm331, %v768, 0.0
        %777 = vrot.lane.b32.xlu0 %v669, 94
        %v778 = vpop.permute.xlu0 %777
        %779 = vrot.lane.b32.xlu0 %v661, 94
        %v780 = vpop.permute.xlu0 %779
        %781 = vrot.lane.b32.xlu0 %v671, 94
        %v782 = vpop.permute.xlu0 %781
        %783 = vrot.lane.b32.xlu0 %v670, 94
        %v784 = vpop.permute.xlu0 %783
        %785 = vrot.lane.b32.xlu0 %v662, 94
        %v786 = vpop.permute.xlu0 %785
        %787 = vrot.lane.b32.xlu0 %v672, 94
        %v788 = vpop.permute.xlu0 %787
        %v789 = vsel %vm456, %v778, %v780
        %v790 = vsel %vm456, %v780, %v782
        %v791 = vsel %vm456, %v784, %v786
        %v792 = vsel %vm456, %v786, %v788
        %v797 = vsel %vm338, %v789, 0.0
        %v798 = vsel %vm339, %v790, 0.0
        %v799 = vsel %vm338, %v791, 0.0
        %v800 = vsel %vm339, %v792, 0.0
        %801 = vrot.lane.b32.xlu0 %v669, 127
        %v802 = vpop.permute.xlu0 %801
        %803 = vrot.lane.b32.xlu0 %v661, 127
        %v804 = vpop.permute.xlu0 %803
        %805 = vrot.lane.b32.xlu0 %v671, 127
        %v806 = vpop.permute.xlu0 %805
        %807 = vrot.lane.b32.xlu0 %v670, 127
        %v808 = vpop.permute.xlu0 %807
        %809 = vrot.lane.b32.xlu0 %v662, 127
        %v810 = vpop.permute.xlu0 %809
        %811 = vrot.lane.b32.xlu0 %v672, 127
        %v812 = vpop.permute.xlu0 %811
        %v813 = vsel %vm481, %v802, %v804
        %v814 = vsel %vm481, %v804, %v806
        %v815 = vsel %vm481, %v808, %v810
        %v816 = vsel %vm481, %v810, %v812
        %821 = vrot.lane.b32.xlu0 %v669, 111
        %v822 = vpop.permute.xlu0 %821
        %823 = vrot.lane.b32.xlu0 %v661, 111
        %v824 = vpop.permute.xlu0 %823
        %825 = vrot.lane.b32.xlu0 %v671, 111
        %v826 = vpop.permute.xlu0 %825
        %827 = vrot.lane.b32.xlu0 %v670, 111
        %v828 = vpop.permute.xlu0 %827
        %829 = vrot.lane.b32.xlu0 %v662, 111
        %v830 = vpop.permute.xlu0 %829
        %831 = vrot.lane.b32.xlu0 %v672, 111
        %v832 = vpop.permute.xlu0 %831
        %v833 = vsel %vm502, %v822, %v824
        %v834 = vsel %vm502, %v824, %v826
        %v835 = vsel %vm502, %v828, %v830
        %v836 = vsel %vm502, %v830, %v832
        %841 = vrot.lane.b32.xlu0 %v669, 95
        %v842 = vpop.permute.xlu0 %841
        %843 = vrot.lane.b32.xlu0 %v661, 95
        %v844 = vpop.permute.xlu0 %843
        %845 = vrot.lane.b32.xlu0 %v671, 95
        %v846 = vpop.permute.xlu0 %845
        %847 = vrot.lane.b32.xlu0 %v670, 95
        %v848 = vpop.permute.xlu0 %847
        %849 = vrot.lane.b32.xlu0 %v662, 95
        %v850 = vpop.permute.xlu0 %849
        %851 = vrot.lane.b32.xlu0 %v672, 95
        %v852 = vpop.permute.xlu0 %851
        %v853 = vsel %vm523, %v842, %v844
        %v854 = vsel %vm523, %v844, %v846
        %v855 = vsel %vm523, %v848, %v850
        %v856 = vsel %vm523, %v850, %v852
        %v861 = vld [vmem:[%s3] sm:$0xff]
        %v862 = vld [vmem:[%s3 + $0x8] sm:$0xff]
        %v863 = vld [vmem:[%s3 + $0x10] sm:$0xff]
        %v864 = vld [vmem:[%s3 + $0x18] sm:$0xff]
        %v865 = vld [vmem:[%s4] sm:$0xff]
        %v866 = vld [vmem:[%s4 + $0x8] sm:$0xff]
        %868 = vset.pattern.permute.xlu0 0
        %869 = vperm.xlu0 %868, %v865
        %v870 = vpop.permute.xlu0 %869
        %873 = vset.pattern.permute.xlu0 0
        %874 = vperm.xlu0 %873, %v866
        %v875 = vpop.permute.xlu0 %874
        %v878 = vsel %vm548, %v862, 0
        %v881 = vsel %vm548, %v864, 0
        %883 = vmatprep.subr.mxu0 %v856
        %884 = vmatpush1.msra.mxu0 %v855
        %885 = vmatprep.subr.mxu0 %v854
        %886 = vmatpush1.msra.mxu0 %v853
        %887 = vmatprep.subr.mxu0 %v776
        %888 = vmatpush1.msra.mxu0 %v775
        %889 = vmatprep.subr.mxu0 %v774
        %890 = vmatpush1.msra.mxu0 %v773
        %891 = vmatprep.subr.mxu0 %v752
        %892 = vmatpush1.msra.mxu0 %v751
        %893 = vmatprep.subr.mxu0 %v750
        %894 = vmatpush1.msra.mxu0 %v749
        %895 = vmatprep.subr.mxu0 %v836
        %896 = vmatpush1.msra.mxu0 %v835
        %897 = vmatprep.subr.mxu0 %v834
        %898 = vmatpush1.msra.mxu0 %v833
        %899 = vmatprep.subr.mxu0 %v728
        %900 = vmatpush1.msra.mxu0 %v727
        %901 = vmatprep.subr.mxu0 %v726
        %902 = vmatpush1.msra.mxu0 %v725
        %903 = vmatprep.subr.mxu0 %v704
        %904 = vmatpush1.msra.mxu0 %v703
        %905 = vmatprep.subr.mxu0 %v702
        %906 = vmatpush1.msra.mxu0 %v701
        %907 = vmatprep.subr.mxu0 %v816
        %908 = vmatpush1.msra.mxu0 %v815
        %909 = vmatprep.subr.mxu0 %v814
        %910 = vmatpush1.msra.mxu0 %v813
        %911 = vmatprep.subr.mxu0 %v676
        %912 = vmatpush1.msra.mxu0 %v675
        %913 = vmatprep.subr.mxu0 %v674
        %914 = vmatpush1.msra.mxu0 %v673
        %915 = vmatprep.subr.mxu0 0.0
        %916 = vmatpush2.msra.mxu0 0.0
        %917 = vmatprep.subr.mxu0 0.0
        %918 = vmatpush2.msra.mxu0 0.0
        %919 = vmatprep.subr.mxu0 0.0
        %920 = vmatpush2.msra.mxu0 0.0
        %921 = vmatprep.subr.mxu0 0.0
        %922 = vmatpush2.msra.mxu0 0.0
        %923 = vmatprep.subr.mxu0 0.0
        %924 = vmatpush2.msra.mxu0 0.0
        %925 = vmatprep.subr.mxu0 0.0
        %926 = vmatpush2.msra.mxu0 0.0
        %927 = vmatprep.subr.mxu0 0.0
        %928 = vmatpush2.msra.mxu0 0.0
        %929 = vmatprep.subr.mxu0 0.0
        %930 = vmatpush2.msra.mxu0 0.0
        %931 = vmatprep.subr.mxu0 0.0
        %932 = vmatpush2.msra.mxu0 0.0
        %933 = vmatprep.subr.mxu0 0.0
        %934 = vmatpush2.msra.mxu0 0.0
        %935 = vmatprep.subr.mxu0 0.0
        %936 = vmatpush2.msra.mxu0 0.0
        %937 = vmatprep.subr.mxu0 0.0
        %938 = vmatpush2.msra.mxu0 0.0
        %939 = vmatprep.subr.mxu0 0.0
        %940 = vmatpush2.msra.mxu0 0.0
        %941 = vmatprep.subr.mxu0 0.0
        %942 = vmatpush2.msra.mxu0 0.0
        %943 = vmatprep.subr.mxu0 %v800
        %944 = vmatpush2.msra.mxu0 %v799
        %945 = vmatprep.subr.mxu0 %v798
        %946 = vmatpush2.msra.mxu0 %v797
        %947 = vmatprep.mubr.f32.mxu0 %v878
        %948 = vmatmul.mubr.f32.gmra.mxu0 %v861
        %v949 = vpop.f32.mrf.mxu0
        %v950 = vadd.f32 %v870, %v949
        %v951 = vpop.f32.mrf.mxu0
        %v952 = vadd.f32 %v870, %v951
        %953 = vmatprep.mubr.f32.mxu0 %v881
        %954 = vmatmul.mubr.f32.gmra.mxu0 %v863
        %v955 = vpop.f32.mrf.mxu0
        %v956 = vadd.f32 %v875, %v955
        %v957 = vpop.f32.mrf.mxu0
        %v958 = vadd.f32 %v875, %v957
        %959 = vdwg.mxu0
        %v960 = vadd.f32 %v950, %v266
        %v961 = vadd.f32 %v952, %v267
        %v962 = vadd.f32 %v956, %v268
        %v963 = vadd.f32 %v958, %v269
        %v964 = vmax.f32 %v960, 0.0
        %v965 = vmax.f32 %v961, 0.0
        %v966 = vmax.f32 %v962, 0.0
        %v967 = vmax.f32 %v963, 0.0
        %v968 = vmin.f32 %v960, 0.0
        %v969 = vmin.f32 %v961, 0.0
        %v970 = vmin.f32 %v962, 0.0
        %v971 = vmin.f32 %v963, 0.0
        %v972 = vstv %s302
        %v973 = vmul.f32 %v972, %v968
        %v974 = vmul.f32 %v972, %v969
        %v975 = vmul.f32 %v972, %v970
        %v976 = vmul.f32 %v972, %v971
        %v977 = vadd.f32 %v964, %v973
        %v978 = vadd.f32 %v965, %v974
        %v979 = vadd.f32 %v966, %v975
        %v980 = vadd.f32 %v967, %v976
        %981 = vst [vmem:[%s265] sm:$0xff] %v977
        %982 = vst [vmem:[%s265 + $0x8] sm:$0xff] %v978
        %983 = vst [vmem:[%s265 + $0x10] sm:$0xff] %v979
        %984 = vst [vmem:[%s265 + $0x18] sm:$0xff] %v980
        %p985 = scmp.lt.s32.totalorder %s18, 1
        %s986 = scalar_select %p985, %s18, 1
        %s987 = smul.addr %s986, 4
        %s988 = smul.addr %s987, 8
        %s989 = scalar_lea.vmem %s6, %s988
        // Predicated region
        $region49: #{normal_block_pallas.1} parent=43 // pred_check
          %p990 = pneg %p167
        $region50: #{normal_block_pallas.1} parent=43 // pred_check_branch
          %992 = sbr.rel (%p990) target = $region52
        $region51: #{normal_block_pallas.1} parent=43 // pred_region
          _
        $region52: #{normal_block_pallas.1} parent=43 // pred_fallthru
          _
      $region44: #{normal_block_pallas.1} parent=5 // pred_fallthru
        _
      %p993 = scmp.le.s32.totalorder 2, %s13
      // Predicated region
      $region53: #{normal_block_pallas.1} parent=5 // pred_check
        %p994 = pneg %p993
      $region54: #{normal_block_pallas.1} parent=5 // pred_check_branch
        %996 = sbr.rel (%p994) target = $region56
      $region55: #{normal_block_pallas.1} parent=5 // pred_region
        %s997 = ssub.s32 %s13, 2
        // Predicated region
        $region57: #{normal_block_pallas.1} parent=55 // pred_check
          %p998 = pneg %p173
        $region58: #{normal_block_pallas.1} parent=55 // pred_check_branch
          %1000 = sbr.rel (%p998) target = $region60
        $region59: #{normal_block_pallas.1} parent=55 // pred_region
          %p1001 = scmp.lt.s32.totalorder %s19, 1
          %s1002 = scalar_select %p1001, %s19, 1
          %s1003 = smul.addr %s1002, 4
          %s1004 = smul.addr %s1003, 8
          %s1005 = scalar_lea.vmem %s6, %s1004
        $region60: #{normal_block_pallas.1} parent=55 // pred_fallthru
          _
      $region56: #{normal_block_pallas.1} parent=5 // pred_fallthru
        _
    $region6: #{normal_block_pallas.1} parent=1 // loop_footer
      %s17 = sadd.s32 1, %s13
    $region7: #{normal_block_pallas.1} parent=1 // loop_footer_branch
      %12 = sbr.rel target = $region3
    $region8: #{normal_block_pallas.1} parent=1 // loop_exit
      _
    %1006 = vsyncpa [#allocation3], 1
    %s1007 = scalar_lea.sflag [#allocation3], 1
    %1008 = vsyncpa %s1007, 1

</llo_original>
